<compile_context>
chip_gen: v5e
topology: v5e:2x2
jax: 0.10.0
libtpu: 0.0.40
codegen_flags: <defaults>
</compile_context>

<pallas_src>
import jax
import jax.numpy as jnp
from jax.experimental import pallas as pl
from jax.experimental.pallas import tpu as pltpu

_TARGET_TILE_BYTES = 1 << 20  # ~1 MiB per operand tile


def _fusion_kernel(wb_ref, x1_ref, x2_ref, o_ref):
    # wb_ref: scalar-prefetched SMEM (3,) float32 -> [w0, w1, bias]
    w0 = wb_ref[0]
    w1 = wb_ref[1]
    b = wb_ref[2]
    # x1_ref / x2_ref / o_ref: VMEM tiles of shape (block_rows, lane)
    o_ref[...] = x1_ref[...] * w0 + x2_ref[...] * w1 + b


def _run_2d(wb, x1_2d, x2_2d, block_rows):
    rows, lane = x1_2d.shape
    grid = (pl.cdiv(rows, block_rows),)
    # index_map receives (grid_idx, *scalar_prefetch_refs)
    spec = pl.BlockSpec((block_rows, lane), lambda i, wb_ref: (i, 0))
    return pl.pallas_call(
        _fusion_kernel,
        out_shape=jax.ShapeDtypeStruct((rows, lane), jnp.float32),
        grid_spec=pltpu.PrefetchScalarGridSpec(
            num_scalar_prefetch=1,
            grid=grid,
            in_specs=[spec, spec],
            out_specs=spec,
        ),
        compiler_params=pltpu.CompilerParams(
            dimension_semantics=("parallel",),
        ),
    )(wb, x1_2d, x2_2d)


def fusion_layer(x1, x2, weight, bias):
    """Apply the SoccerMap fusion layer.

    x1, x2: (N, 1, H, W) float32 prediction surfaces.
    weight: (1, 2, 1, 1) float32 — Conv2d(2, 1, 1) weight.
    bias:   (1,) float32.
    Returns (N, 1, H, W) float32.
    """
    N, C, H, W = x1.shape
    assert C == 1 and x2.shape == x1.shape

    # Pack the 1x1-conv parameters into a tiny SMEM-resident vector.
    wb = jnp.concatenate(
        [weight.reshape(2).astype(jnp.float32), bias.reshape(1).astype(jnp.float32)]
    )

    x1 = x1.astype(jnp.float32)
    x2 = x2.astype(jnp.float32)
    total = N * C * H * W

    # ---- pick a copy-free, lane-dense 2D view ----------------------------
    lane = next((l for l in (512, 256, 128) if total % l == 0), None)
    if lane is not None:
        rows = total // lane
    else:
        # Last dim equals the full array dim, so any width is a legal block;
        # still a free reshape of the contiguous NCHW buffer.
        rows, lane = N, C * H * W

    x1_2d = x1.reshape(rows, lane)
    x2_2d = x2.reshape(rows, lane)

    # ---- row-block size: ~1 MiB per operand tile --------------------------
    target_rows = max(8, _TARGET_TILE_BYTES // (4 * lane))
    if rows <= target_rows:
        block_rows = rows                      # single block == full dim
    else:
        block_rows = (target_rows // 8) * 8    # sublane-aligned; ragged tail clipped

    out_2d = _run_2d(wb, x1_2d, x2_2d, block_rows)
    return out_2d.reshape(N, C, H, W)


if __name__ == "__main__":
    key = jax.random.PRNGKey(0)
    k1, k2, kw, kb = jax.random.split(key, 4)

    # Deterministic Conv2d(2, 1, kernel_size=1) parameters (synthetic init,
    # same shapes as the PyTorch module: weight (1,2,1,1), bias (1,)).
    fan_in = 2  # in_channels * kH * kW
    bound = 1.0 / jnp.sqrt(fan_in)
    weight = jax.random.uniform(kw, (1, 2, 1, 1), jnp.float32, -bound, bound)
    bias = jax.random.uniform(kb, (1,), jnp.float32, -bound, bound)

    # Case 1: lane-aligned shape (hits the lane-dense primary path).
    N, H, W = 2, 16, 16
    x1 = jax.random.normal(k1, (N, 1, H, W), dtype=jnp.float32)
    x2 = jax.random.normal(k2, (N, 1, H, W), dtype=jnp.float32)
    out = jax.block_until_ready(fusion_layer(x1, x2, weight, bias))
    ref = x1 * weight[0, 0, 0, 0] + x2 * weight[0, 1, 0, 0] + bias[0]
    assert out.shape == (N, 1, H, W)
    assert jnp.allclose(out, ref, atol=1e-6, rtol=1e-6)

    # Case 2: non-128-aligned spatial shape (hits the copy-free fallback path).
    N2, H2, W2 = 3, 13, 11
    y1 = jax.random.normal(k1, (N2, 1, H2, W2), dtype=jnp.float32)
    y2 = jax.random.normal(k2, (N2, 1, H2, W2), dtype=jnp.float32)
    out2 = jax.block_until_ready(fusion_layer(y1, y2, weight, bias))
    ref2 = y1 * weight[0, 0, 0, 0] + y2 * weight[0, 1, 0, 0] + bias[0]
    assert out2.shape == (N2, 1, H2, W2)
    assert jnp.allclose(out2, ref2, atol=1e-6, rtol=1e-6)

    print("KERNEL_OK")
</pallas_src>

<mosaic_0001>
module attributes {stable_mosaic.version = 11 : i64} {
  func.func @_fusion_kernel(%arg0: i32, %arg1: memref<3xf32, #tpu.memory_space<smem>>, %arg2: memref<1x512xf32, #tpu.memory_space<vmem>>, %arg3: memref<1x512xf32, #tpu.memory_space<vmem>>, %arg4: memref<1x512xf32, #tpu.memory_space<vmem>>) attributes {dimension_semantics = [#tpu.dimension_semantics<parallel>], iteration_bounds = array<i64: 1>, scalar_prefetch = 1 : i64, scratch_operands = 0 : i64, tpu.core_type = #tpu.core_type<tc>, window_params = [{transform_indices = @transform_0, window_bounds = array<i64: 1, 512>}, {transform_indices = @transform_1, window_bounds = array<i64: 1, 512>}, {transform_indices = @transform_2, window_bounds = array<i64: 1, 512>}]} {
    %c0 = arith.constant 0 : index
    %0 = memref.load %arg1[%c0] : memref<3xf32, #tpu.memory_space<smem>>
    %c1 = arith.constant 1 : index
    %1 = memref.load %arg1[%c1] : memref<3xf32, #tpu.memory_space<smem>>
    %c2 = arith.constant 2 : index
    %2 = memref.load %arg1[%c2] : memref<3xf32, #tpu.memory_space<smem>>
    %c0_0 = arith.constant 0 : index
    %c0_1 = arith.constant 0 : index
    %3 = vector.load %arg2[%c0_0, %c0_1] : memref<1x512xf32, #tpu.memory_space<vmem>>, vector<1x512xf32>
    %4 = vector.broadcast %0 : f32 to vector<1x512xf32>
    %5 = arith.mulf %3, %4 : vector<1x512xf32>
    %c0_2 = arith.constant 0 : index
    %c0_3 = arith.constant 0 : index
    %6 = vector.load %arg3[%c0_2, %c0_3] : memref<1x512xf32, #tpu.memory_space<vmem>>, vector<1x512xf32>
    %7 = vector.broadcast %1 : f32 to vector<1x512xf32>
    %8 = arith.mulf %6, %7 : vector<1x512xf32>
    %9 = arith.addf %5, %8 : vector<1x512xf32>
    %10 = vector.broadcast %2 : f32 to vector<1x512xf32>
    %11 = arith.addf %9, %10 : vector<1x512xf32>
    %c0_4 = arith.constant 0 : index
    %c0_5 = arith.constant 0 : index
    %12 = vector.load %arg4[%c0_4, %c0_5] : memref<1x512xf32, #tpu.memory_space<vmem>>, vector<1x512xf32>
    tpu.vector_store %arg4[%c0_4, %c0_5], %11 {strides = array<i32>} : memref<1x512xf32, #tpu.memory_space<vmem>>, vector<1x512xf32>,
    return
  }
  func.func @transform_0(%arg0: i32, %arg1: memref<3xf32, #tpu.memory_space<smem>>) -> (i32, i32) {
    %c0_i32 = arith.constant 0 : i32
    %c0_i32_0 = arith.constant 0 : i32
    return %arg0, %c0_i32 : i32, i32
  }
  func.func @transform_1(%arg0: i32, %arg1: memref<3xf32, #tpu.memory_space<smem>>) -> (i32, i32) {
    %c0_i32 = arith.constant 0 : i32
    %c0_i32_0 = arith.constant 0 : i32
    return %arg0, %c0_i32 : i32, i32
  }
  func.func @transform_2(%arg0: i32, %arg1: memref<3xf32, #tpu.memory_space<smem>>) -> (i32, i32) {
    %c0_i32 = arith.constant 0 : i32
    %c0_i32_0 = arith.constant 0 : i32
    return %arg0, %c0_i32 : i32, i32
  }
}

</mosaic_0001>

<llo_original>
// kernel: tpu_custom_call.1
$region0: #{tpu_custom_call.1}
  #allocation0 [shape = 'u32[]', space=smem, size = 0x4, offset = 0x4, fixed_abs, tag = 'smem constant byte address 0x4 - core index']
  #allocation1 [shape = 'u32[72,128]{1,0:T(1,128)}', space=vmem, size = 0x9000, scoped, tag = 'internal scratch']
  #allocation2 [shape = 's32[1]{0}', space=sflag, size = 0x4, scoped, tag = 'scoped memory for tpu_custom_call.1']
  #allocation3 [shape = 'u8[512]{0}', space=smem, size = 0x200, scoped, tag = 'prefetched SMEM operand 0']
  %s0 = inlined_call_operand.hbm [shape: f32[3], index: 0, kind: input, shape index: {}]
  %s1 = inlined_call_operand.hbm [shape: f32[1,512], index: 1, kind: input, shape index: {}]
  %s2 = inlined_call_operand.hbm [shape: f32[1,512], index: 2, kind: input, shape index: {}]
  %s3 = inlined_call_operand.hbm [shape: f32[1,512], index: 3, kind: output, shape index: {}]
  %s4 = sld [smem:[#allocation0]]
  $region26: #{tpu_custom_call.1} parent=0
    _
  %s6 = ssub.s32 1, %s4
  %s7 = scalar_select 0, %s6, %s4
  %s9 = sshll.u32 %s0, 4
  %s10 = int_to_ptr.hbm [resolvable:$true] %s9
  %12 = dma.hbm_to_smem %s10, 16, [#allocation3], [#allocation2]
  %14 = dma.done [#allocation2], 16
  %15 = sfence
  $region1: #{tpu_custom_call.1} parent=0
    #allocation4 [shape = 'u8[2048]{0}', space=vmem, size = 0x800, scoped, tag = 'input window, operand 1, single buffered']
    #allocation5 [shape = 's32[1]{0}', space=sflag, size = 0x4, scoped, tag = 'scoped memory for tpu_custom_call.1']
    #allocation6 [shape = 's32[1]{0}', space=sflag, size = 0x4, scoped, tag = 'scoped memory for tpu_custom_call.1']
    #allocation7 [shape = 'u8[2048]{0}', space=vmem, size = 0x800, scoped, tag = 'input window, operand 2, single buffered']
    #allocation8 [shape = 's32[1]{0}', space=sflag, size = 0x4, scoped, tag = 'scoped memory for tpu_custom_call.1']
    #allocation9 [shape = 'u8[2048]{0}', space=vmem, size = 0x800, scoped, tag = 'output window, operand 0, single buffered']
    %16 = vsyncpa [#allocation5], 0
    %17 = vsyncpa [#allocation8], 0
    %18 = vsyncpa [#allocation6], 0
    // Predicated region
    $region2: #{tpu_custom_call.1} parent=1 // pred_check
      _
    $region3: #{tpu_custom_call.1} parent=1 // pred_check_branch
      %20 = sbr.rel (0) target = $region5
    $region4: #{tpu_custom_call.1} parent=1 // pred_region
      %22 = vsyncadd [#allocation5], 0
      %s24 = sshll.u32 %s1, 4
      %s25 = int_to_ptr.hbm [resolvable:$true] %s24
      %s26 = sshll.u32 [#allocation4], 4
      %s27 = int_to_ptr.vmem [resolvable:$true] %s26
      %29 = dma.hbm_to_vmem [thread:$0]  %s25, 64, %s27, [#allocation5]
    $region5: #{tpu_custom_call.1} parent=1 // pred_fallthru
      _
    // Predicated region
    $region6: #{tpu_custom_call.1} parent=1 // pred_check
      _
    $region7: #{tpu_custom_call.1} parent=1 // pred_check_branch
      %31 = sbr.rel (0) target = $region9
    $region8: #{tpu_custom_call.1} parent=1 // pred_region
      %33 = vsyncadd [#allocation8], 0
      %s35 = sshll.u32 %s2, 4
      %s36 = int_to_ptr.hbm [resolvable:$true] %s35
      %s37 = sshll.u32 [#allocation7], 4
      %s38 = int_to_ptr.vmem [resolvable:$true] %s37
      %40 = dma.hbm_to_vmem [thread:$0]  %s36, 64, %s38, [#allocation8]
    $region9: #{tpu_custom_call.1} parent=1 // pred_fallthru
      _
    // Predicated region
    $region10: #{tpu_custom_call.1} parent=1 // pred_check
      _
    $region11: #{tpu_custom_call.1} parent=1 // pred_check_branch
      %42 = sbr.rel (0) target = $region13
    $region12: #{tpu_custom_call.1} parent=1 // pred_region
      %44 = dma.done [#allocation5], 64
    $region13: #{tpu_custom_call.1} parent=1 // pred_fallthru
      _
    // Predicated region
    $region14: #{tpu_custom_call.1} parent=1 // pred_check
      _
    $region15: #{tpu_custom_call.1} parent=1 // pred_check_branch
      %46 = sbr.rel (0) target = $region17
    $region16: #{tpu_custom_call.1} parent=1 // pred_region
      %48 = dma.done [#allocation8], 64
    $region17: #{tpu_custom_call.1} parent=1 // pred_fallthru
      _
    %s49 = sld [smem:[#allocation3]]
    %s50 = sld [smem:[#allocation3 + $0x1]]
    %s51 = sld [smem:[#allocation3 + $0x2]]
    %v52 = vld [vmem:[#allocation4] sm:$0xf]
    %v53 = vstv %s49
    %v54 = vmul.f32 %v52, %v53
    %v55 = vld [vmem:[#allocation7] sm:$0xf]
    %v56 = vstv %s50
    %v57 = vmul.f32 %v55, %v56
    %v58 = vadd.f32 %v54, %v57
    %v59 = vstv %s51
    %v60 = vadd.f32 %v58, %v59
    %v61 = vlaneseq
    %vm62 = vcmp.ge.s32.totalorder %v61, 0
    %vm63 = vcmp.lt.s32.totalorder %v61, 512
    %vm64 = vmand %vm62, %vm63
    %65 = vst.msk [vmem:[#allocation9] sm:$0xf] %vm64, %v60
    // Predicated region
    $region18: #{tpu_custom_call.1} parent=1 // pred_check
      _
    $region19: #{tpu_custom_call.1} parent=1 // pred_check_branch
      %67 = sbr.rel (0) target = $region21
    $region20: #{tpu_custom_call.1} parent=1 // pred_region
      %69 = vsyncadd [#allocation6], 0
      %s71 = sshll.u32 [#allocation9], 4
      %s72 = int_to_ptr.vmem [resolvable:$true] %s71
      %s73 = sshll.u32 %s3, 4
      %s74 = int_to_ptr.hbm [resolvable:$true] %s73
      %76 = dma.vmem_to_hbm [thread:$0]  %s72, 64, %s74, [#allocation6]
    $region21: #{tpu_custom_call.1} parent=1 // pred_fallthru
      _
    // Predicated region
    $region22: #{tpu_custom_call.1} parent=1 // pred_check
      _
    $region23: #{tpu_custom_call.1} parent=1 // pred_check_branch
      %78 = sbr.rel (0) target = $region25
    $region24: #{tpu_custom_call.1} parent=1 // pred_region
      %80 = dma.done [#allocation6], 64
    $region25: #{tpu_custom_call.1} parent=1 // pred_fallthru
      _
    %81 = vsyncpa [#allocation5], 1
    %82 = vsyncpa [#allocation8], 1
    %83 = vsyncpa [#allocation6], 1

</llo_original>
